<compile_context>
chip_gen: v7x
topology: tpu7x:2x2x1
jax: 0.10.0
libtpu: 0.0.40
codegen_flags: <defaults>
</compile_context>

<pallas_src>
import functools
import math

import jax
import jax.numpy as jnp
from jax.experimental import pallas as pl
from jax.experimental.pallas import tpu as pltpu


def _round_up(a, m):
    return (a + m - 1) // m * m


def _tile_policy():
    """Per-generation (max_tile_n, vmem_limit_bytes, min_blocks)."""
    max_tile_n, vmem_limit, min_blocks = 8192, 48 * 1024 * 1024, 1   # safe default
    try:
        dev = jax.devices()[0]
        kind = dev.device_kind.lower()
        if dev.platform == "tpu":
            if "7" in kind:
                # v7x: 64 MiB physical VMEM, 2 TensorCores/chip -> cap tiles, force a
                # 2-way "parallel" split of the N axis so both cores get work.
                max_tile_n, vmem_limit, min_blocks = 8192, 48 * 1024 * 1024, 2
            else:
                # v5e / v6e: 128 MiB VMEM, single TensorCore -> maximize the tile so
                # the ~0.35 us per-grid-step overhead is a few % of the HBM roofline.
                max_tile_n, vmem_limit, min_blocks = 16384, 64 * 1024 * 1024, 1
    except Exception:
        pass
    return max_tile_n, vmem_limit, min_blocks


def pinn_block_kernel(x_ref, wt_ref, b_ref, o_ref, *, activation):
    """activation(x @ w^T + b) for one (tile_n, out_dim) output block.

    x_ref : (tile_n, in_dim)     wt_ref: (in_dim, out_dim)   [w transposed]
    b_ref : (1, out_dim)         o_ref : (tile_n, out_dim)

    `activation` must be elementwise: zero-padded rows compute activation(b) and are
    sliced off by the wrapper; a reducing/normalising activation along N would be
    contaminated by them.
    """
    in_dim = x_ref.shape[1]
    x = x_ref[...].astype(jnp.float32)
    wt = wt_ref[...].astype(jnp.float32)

    if in_dim <= 8:
        # Tiny K (2 for (x, t) collocation inputs): VPU multiply-adds, no MXU.
        # acc is initialised from the k=0 term (no separate bias broadcast temp).
        acc = x[:, 0:1] * wt[0:1, :]
        for k in range(1, in_dim):
            acc = acc + x[:, k:k + 1] * wt[k:k + 1, :]
    else:
        # Wider feature inputs (hidden-layer sized blocks): use the MXU.
        acc = jnp.dot(x, wt, preferred_element_type=jnp.float32)

    o_ref[...] = activation(acc + b_ref[...]).astype(o_ref.dtype)


def pinn_block(x, w, b, *, activation=jnp.tanh):
    """Forward of PINNBlock: activation(x @ w.T + b)  (PyTorch nn.Linear semantics).

    x: (N, in_dim) f32, w: (out_dim, in_dim) f32 (PyTorch layout), b: (out_dim,) f32.
    Returns (N, out_dim) f32.  No transposes of x or the output are performed.
    """
    N, in_dim = x.shape
    out_dim, in_dim_w = w.shape
    assert in_dim_w == in_dim

    max_tile_n, vmem_limit, min_blocks = _tile_policy()

    # Minimal padding: round N to the sublane granule, then split evenly into blocks.
    n_pad = _round_up(N, 8)
    num_blocks = -(-n_pad // max_tile_n)                 # cdiv
    if n_pad >= 2 * 128:                                 # only force a core split when
        num_blocks = max(num_blocks, min_blocks)         # there is enough work
    tile_n = _round_up(-(-n_pad // num_blocks), 8)
    n_pad = tile_n * num_blocks

    if n_pad != N:
        x = jnp.pad(x, ((0, n_pad - N), (0, 0)))
    wt = w.T                              # (in_dim, out_dim): tiny, grid-resident
    b2d = b.reshape(1, out_dim)

    y = pl.pallas_call(
        functools.partial(pinn_block_kernel, activation=activation),
        out_shape=jax.ShapeDtypeStruct((n_pad, out_dim), x.dtype),
        grid_spec=pltpu.PrefetchScalarGridSpec(
            num_scalar_prefetch=0,
            grid=(num_blocks,),
            in_specs=[
                pl.BlockSpec((tile_n, in_dim), lambda i: (i, 0)),    # x row tile
                pl.BlockSpec((in_dim, out_dim), lambda i: (0, 0)),   # w^T (resident)
                pl.BlockSpec((1, out_dim), lambda i: (0, 0)),        # bias (resident)
            ],
            out_specs=pl.BlockSpec((tile_n, out_dim), lambda i: (i, 0)),
        ),
        compiler_params=pltpu.CompilerParams(
            dimension_semantics=("parallel",),
            vmem_limit_bytes=vmem_limit,
        ),
    )(x, wt, b2d)

    return y[:N] if n_pad != N else y


def init_params(key, input_dim, output_dim):
    # PyTorch: nn.init.xavier_uniform_(weight of shape (out, in)); bias zeros.
    bound = math.sqrt(6.0 / (input_dim + output_dim))
    w = jax.random.uniform(
        key, (output_dim, input_dim), minval=-bound, maxval=bound,
        dtype=jnp.float32)                      # PyTorch (out, in) layout
    b = jnp.zeros((output_dim,), jnp.float32)
    return w, b


if __name__ == "__main__":
    # Buckley-Leverett PINN block: inputs are (x, t) collocation points ->
    # input_dim=2, hidden width 64, tanh activation.
    N, input_dim, output_dim = 256, 2, 64

    key = jax.random.PRNGKey(0)
    kx, kw, kx2 = jax.random.split(key, 3)
    x = jax.random.normal(kx, (N, input_dim), dtype=jnp.float32)
    w, b = init_params(kw, input_dim, output_dim)

    out = jax.block_until_ready(pinn_block(x, w, b, activation=jnp.tanh))

    # Reference in plain JAX: activation(layer(x)) with PyTorch Linear semantics.
    ref = jnp.tanh(x @ w.T + b[None, :])
    assert out.shape == (N, output_dim)
    assert jnp.allclose(out, ref, atol=1e-5, rtol=1e-5)

    # Exercise the padding path with an odd N (rows rounded up to a multiple of 8).
    N2 = 100
    x2 = jax.random.normal(kx2, (N2, input_dim), dtype=jnp.float32)
    out2 = jax.block_until_ready(pinn_block(x2, w, b, activation=jnp.tanh))
    ref2 = jnp.tanh(x2 @ w.T + b[None, :])
    assert out2.shape == (N2, output_dim)
    assert jnp.allclose(out2, ref2, atol=1e-5, rtol=1e-5)

    print("KERNEL_OK")
</pallas_src>

<mosaic_0001>
module attributes {stable_mosaic.version = 11 : i64} {
  func.func @pinn_block_kernel(%arg0: i32, %arg1: memref<256x2xf32, #tpu.memory_space<vmem>>, %arg2: memref<2x64xf32, #tpu.memory_space<vmem>>, %arg3: memref<1x64xf32, #tpu.memory_space<vmem>>, %arg4: memref<256x64xf32, #tpu.memory_space<vmem>>) attributes {dimension_semantics = [#tpu.dimension_semantics<parallel>], iteration_bounds = array<i64: 1>, scalar_prefetch = 0 : i64, scratch_operands = 0 : i64, tpu.core_type = #tpu.core_type<tc>, window_params = [{transform_indices = @transform_0, window_bounds = array<i64: 256, 2>}, {pipeline_mode = #tpu.pipeline_mode<synchronous>, transform_indices = @transform_1, window_bounds = array<i64: 2, 64>}, {pipeline_mode = #tpu.pipeline_mode<synchronous>, transform_indices = @transform_2, window_bounds = array<i64: 1, 64>}, {transform_indices = @transform_3, window_bounds = array<i64: 256, 64>}]} {
    %c0 = arith.constant 0 : index
    %c0_0 = arith.constant 0 : index
    %0 = vector.load %arg1[%c0, %c0_0] : memref<256x2xf32, #tpu.memory_space<vmem>>, vector<256x2xf32>
    %c0_1 = arith.constant 0 : index
    %c0_2 = arith.constant 0 : index
    %1 = vector.load %arg2[%c0_1, %c0_2] : memref<2x64xf32, #tpu.memory_space<vmem>>, vector<2x64xf32>
    %2 = vector.extract_strided_slice %0 {offsets = [0, 0], sizes = [256, 1], strides = [1, 1]} : vector<256x2xf32> to vector<256x1xf32>
    %3 = vector.extract_strided_slice %1 {offsets = [0, 0], sizes = [1, 64], strides = [1, 1]} : vector<2x64xf32> to vector<1x64xf32>
    %4 = vector.broadcast %2 : vector<256x1xf32> to vector<256x64xf32>
    %5 = vector.broadcast %3 : vector<1x64xf32> to vector<256x64xf32>
    %6 = arith.mulf %4, %5 : vector<256x64xf32>
    %7 = vector.extract_strided_slice %0 {offsets = [0, 1], sizes = [256, 1], strides = [1, 1]} : vector<256x2xf32> to vector<256x1xf32>
    %8 = vector.extract_strided_slice %1 {offsets = [1, 0], sizes = [1, 64], strides = [1, 1]} : vector<2x64xf32> to vector<1x64xf32>
    %9 = vector.broadcast %7 : vector<256x1xf32> to vector<256x64xf32>
    %10 = vector.broadcast %8 : vector<1x64xf32> to vector<256x64xf32>
    %11 = arith.mulf %9, %10 : vector<256x64xf32>
    %12 = arith.addf %6, %11 : vector<256x64xf32>
    %c0_3 = arith.constant 0 : index
    %c0_4 = arith.constant 0 : index
    %13 = vector.load %arg3[%c0_3, %c0_4] : memref<1x64xf32, #tpu.memory_space<vmem>>, vector<1x64xf32>
    %14 = vector.broadcast %13 : vector<1x64xf32> to vector<256x64xf32>
    %15 = arith.addf %12, %14 : vector<256x64xf32>
    %16 = math.tanh %15 : vector<256x64xf32>
    %c0_5 = arith.constant 0 : index
    %c0_6 = arith.constant 0 : index
    %17 = vector.load %arg4[%c0_5, %c0_6] : memref<256x64xf32, #tpu.memory_space<vmem>>, vector<256x64xf32>
    tpu.vector_store %arg4[%c0_5, %c0_6], %16 {strides = array<i32>} : memref<256x64xf32, #tpu.memory_space<vmem>>, vector<256x64xf32>,
    return
  }
  func.func @transform_0(%arg0: i32) -> (i32, i32) {
    %c0_i32 = arith.constant 0 : i32
    %c0_i32_0 = arith.constant 0 : i32
    return %arg0, %c0_i32 : i32, i32
  }
  func.func @transform_1(%arg0: i32) -> (i32, i32) {
    %c0_i32 = arith.constant 0 : i32
    %c0_i32_0 = arith.constant 0 : i32
    %c0_i32_1 = arith.constant 0 : i32
    return %c0_i32, %c0_i32_0 : i32, i32
  }
  func.func @transform_2(%arg0: i32) -> (i32, i32) {
    %c0_i32 = arith.constant 0 : i32
    %c0_i32_0 = arith.constant 0 : i32
    %c0_i32_1 = arith.constant 0 : i32
    return %c0_i32, %c0_i32_0 : i32, i32
  }
  func.func @transform_3(%arg0: i32) -> (i32, i32) {
    %c0_i32 = arith.constant 0 : i32
    %c0_i32_0 = arith.constant 0 : i32
    return %arg0, %c0_i32 : i32, i32
  }
}

</mosaic_0001>

<llo_original>
// kernel: tpu_custom_call.1
$region0: #{tpu_custom_call.1}
  #allocation0 [shape = 'u32[]', space=smem, size = 0x4, offset = 0x4, fixed_abs, tag = 'smem constant byte address 0x4 - core index']
  #allocation1 [shape = 'u32[144,128]{1,0:T(1,128)}', space=vmem, size = 0x12000, scoped, tag = 'internal scratch']
  %s0 = inlined_call_operand.vmem [shape: f32[256,2], index: 0, kind: input, shape index: {}]
  %s1 = inlined_call_operand.vmem [shape: f32[2,64], index: 1, kind: input, shape index: {}]
  %s2 = inlined_call_operand.vmem [shape: f32[1,64], index: 2, kind: input, shape index: {}]
  %s3 = inlined_call_operand.vmem [shape: f32[256,64], index: 3, kind: output, shape index: {}]
  %s4 = sld [smem:[#allocation0]]
  $region22: #{tpu_custom_call.1} parent=0
    _
  %s6 = ssub.s32 1, %s4
  %s7 = scalar_select 0, %s6, %s4
  // Predicated region
  $region2: #{tpu_custom_call.1} parent=0 // pred_check
    _
  $region3: #{tpu_custom_call.1} parent=0 // pred_check_branch
    %9 = sbr.rel (0) target = $region5
  $region4: #{tpu_custom_call.1} parent=0 // pred_region
    _
  $region5: #{tpu_custom_call.1} parent=0 // pred_fallthru
    _
  // Predicated region
  $region6: #{tpu_custom_call.1} parent=0 // pred_check
    _
  $region7: #{tpu_custom_call.1} parent=0 // pred_check_branch
    %11 = sbr.rel (0) target = $region9
  $region8: #{tpu_custom_call.1} parent=0 // pred_region
    _
  $region9: #{tpu_custom_call.1} parent=0 // pred_fallthru
    _
  // Predicated region
  $region10: #{tpu_custom_call.1} parent=0 // pred_check
    _
  $region11: #{tpu_custom_call.1} parent=0 // pred_check_branch
    %13 = sbr.rel (0) target = $region13
  $region12: #{tpu_custom_call.1} parent=0 // pred_region
    _
  $region13: #{tpu_custom_call.1} parent=0 // pred_fallthru
    _
  %v14 = vld [vmem:[%s0] sm:$0xff]
  %v15 = vld [vmem:[%s0 + $0x8] sm:$0xff]
  %v16 = vld [vmem:[%s0 + $0x10] sm:$0xff]
  %v17 = vld [vmem:[%s0 + $0x18] sm:$0xff]
  %v18 = vld [vmem:[%s0 + $0x20] sm:$0xff]
  %v19 = vld [vmem:[%s0 + $0x28] sm:$0xff]
  %v20 = vld [vmem:[%s0 + $0x30] sm:$0xff]
  %v21 = vld [vmem:[%s0 + $0x38] sm:$0xff]
  %v22 = vld [vmem:[%s0 + $0x40] sm:$0xff]
  %v23 = vld [vmem:[%s0 + $0x48] sm:$0xff]
  %v24 = vld [vmem:[%s0 + $0x50] sm:$0xff]
  %v25 = vld [vmem:[%s0 + $0x58] sm:$0xff]
  %v26 = vld [vmem:[%s0 + $0x60] sm:$0xff]
  %v27 = vld [vmem:[%s0 + $0x68] sm:$0xff]
  %v28 = vld [vmem:[%s0 + $0x70] sm:$0xff]
  %v29 = vld [vmem:[%s0 + $0x78] sm:$0xff]
  %v30 = vld [vmem:[%s0 + $0x80] sm:$0xff]
  %v31 = vld [vmem:[%s0 + $0x88] sm:$0xff]
  %v32 = vld [vmem:[%s0 + $0x90] sm:$0xff]
  %v33 = vld [vmem:[%s0 + $0x98] sm:$0xff]
  %v34 = vld [vmem:[%s0 + $0xa0] sm:$0xff]
  %v35 = vld [vmem:[%s0 + $0xa8] sm:$0xff]
  %v36 = vld [vmem:[%s0 + $0xb0] sm:$0xff]
  %v37 = vld [vmem:[%s0 + $0xb8] sm:$0xff]
  %v38 = vld [vmem:[%s0 + $0xc0] sm:$0xff]
  %v39 = vld [vmem:[%s0 + $0xc8] sm:$0xff]
  %v40 = vld [vmem:[%s0 + $0xd0] sm:$0xff]
  %v41 = vld [vmem:[%s0 + $0xd8] sm:$0xff]
  %v42 = vld [vmem:[%s0 + $0xe0] sm:$0xff]
  %v43 = vld [vmem:[%s0 + $0xe8] sm:$0xff]
  %v44 = vld [vmem:[%s0 + $0xf0] sm:$0xff]
  %v45 = vld [vmem:[%s0 + $0xf8] sm:$0xff]
  %v46 = vld [vmem:[%s1] sm:$0x3]
  %48 = vset.pattern.permute.xlu0 0
  %49 = vperm.xlu0 %48, %v14
  %v50 = vpop.permute.xlu0 %49
  %53 = vset.pattern.permute.xlu0 0
  %54 = vperm.xlu0 %53, %v15
  %v55 = vpop.permute.xlu0 %54
  %58 = vset.pattern.permute.xlu0 0
  %59 = vperm.xlu0 %58, %v16
  %v60 = vpop.permute.xlu0 %59
  %63 = vset.pattern.permute.xlu0 0
  %64 = vperm.xlu0 %63, %v17
  %v65 = vpop.permute.xlu0 %64
  %68 = vset.pattern.permute.xlu0 0
  %69 = vperm.xlu0 %68, %v18
  %v70 = vpop.permute.xlu0 %69
  %73 = vset.pattern.permute.xlu0 0
  %74 = vperm.xlu0 %73, %v19
  %v75 = vpop.permute.xlu0 %74
  %78 = vset.pattern.permute.xlu0 0
  %79 = vperm.xlu0 %78, %v20
  %v80 = vpop.permute.xlu0 %79
  %83 = vset.pattern.permute.xlu0 0
  %84 = vperm.xlu0 %83, %v21
  %v85 = vpop.permute.xlu0 %84
  %88 = vset.pattern.permute.xlu0 0
  %89 = vperm.xlu0 %88, %v22
  %v90 = vpop.permute.xlu0 %89
  %93 = vset.pattern.permute.xlu0 0
  %94 = vperm.xlu0 %93, %v23
  %v95 = vpop.permute.xlu0 %94
  %98 = vset.pattern.permute.xlu0 0
  %99 = vperm.xlu0 %98, %v24
  %v100 = vpop.permute.xlu0 %99
  %103 = vset.pattern.permute.xlu0 0
  %104 = vperm.xlu0 %103, %v25
  %v105 = vpop.permute.xlu0 %104
  %108 = vset.pattern.permute.xlu0 0
  %109 = vperm.xlu0 %108, %v26
  %v110 = vpop.permute.xlu0 %109
  %113 = vset.pattern.permute.xlu0 0
  %114 = vperm.xlu0 %113, %v27
  %v115 = vpop.permute.xlu0 %114
  %118 = vset.pattern.permute.xlu0 0
  %119 = vperm.xlu0 %118, %v28
  %v120 = vpop.permute.xlu0 %119
  %123 = vset.pattern.permute.xlu0 0
  %124 = vperm.xlu0 %123, %v29
  %v125 = vpop.permute.xlu0 %124
  %128 = vset.pattern.permute.xlu0 0
  %129 = vperm.xlu0 %128, %v30
  %v130 = vpop.permute.xlu0 %129
  %133 = vset.pattern.permute.xlu0 0
  %134 = vperm.xlu0 %133, %v31
  %v135 = vpop.permute.xlu0 %134
  %138 = vset.pattern.permute.xlu0 0
  %139 = vperm.xlu0 %138, %v32
  %v140 = vpop.permute.xlu0 %139
  %143 = vset.pattern.permute.xlu0 0
  %144 = vperm.xlu0 %143, %v33
  %v145 = vpop.permute.xlu0 %144
  %148 = vset.pattern.permute.xlu0 0
  %149 = vperm.xlu0 %148, %v34
  %v150 = vpop.permute.xlu0 %149
  %153 = vset.pattern.permute.xlu0 0
  %154 = vperm.xlu0 %153, %v35
  %v155 = vpop.permute.xlu0 %154
  %158 = vset.pattern.permute.xlu0 0
  %159 = vperm.xlu0 %158, %v36
  %v160 = vpop.permute.xlu0 %159
  %163 = vset.pattern.permute.xlu0 0
  %164 = vperm.xlu0 %163, %v37
  %v165 = vpop.permute.xlu0 %164
  %168 = vset.pattern.permute.xlu0 0
  %169 = vperm.xlu0 %168, %v38
  %v170 = vpop.permute.xlu0 %169
  %173 = vset.pattern.permute.xlu0 0
  %174 = vperm.xlu0 %173, %v39
  %v175 = vpop.permute.xlu0 %174
  %178 = vset.pattern.permute.xlu0 0
  %179 = vperm.xlu0 %178, %v40
  %v180 = vpop.permute.xlu0 %179
  %183 = vset.pattern.permute.xlu0 0
  %184 = vperm.xlu0 %183, %v41
  %v185 = vpop.permute.xlu0 %184
  %188 = vset.pattern.permute.xlu0 0
  %189 = vperm.xlu0 %188, %v42
  %v190 = vpop.permute.xlu0 %189
  %193 = vset.pattern.permute.xlu0 0
  %194 = vperm.xlu0 %193, %v43
  %v195 = vpop.permute.xlu0 %194
  %198 = vset.pattern.permute.xlu0 0
  %199 = vperm.xlu0 %198, %v44
  %v200 = vpop.permute.xlu0 %199
  %203 = vset.pattern.permute.xlu0 0
  %204 = vperm.xlu0 %203, %v45
  %v205 = vpop.permute.xlu0 %204
  %v207 = vlaneseq
  %v208 = vshrl.u32 %v207, 7
  %v209 = vsub.s32 0, %v208
  %v210 = vrot.slane %v46, %v209
  %v211 = vmul.f32 %v50, %v210
  %v212 = vmul.f32 %v55, %v210
  %v213 = vmul.f32 %v60, %v210
  %v214 = vmul.f32 %v65, %v210
  %v215 = vmul.f32 %v70, %v210
  %v216 = vmul.f32 %v75, %v210
  %v217 = vmul.f32 %v80, %v210
  %v218 = vmul.f32 %v85, %v210
  %v219 = vmul.f32 %v90, %v210
  %v220 = vmul.f32 %v95, %v210
  %v221 = vmul.f32 %v100, %v210
  %v222 = vmul.f32 %v105, %v210
  %v223 = vmul.f32 %v110, %v210
  %v224 = vmul.f32 %v115, %v210
  %v225 = vmul.f32 %v120, %v210
  %v226 = vmul.f32 %v125, %v210
  %v227 = vmul.f32 %v130, %v210
  %v228 = vmul.f32 %v135, %v210
  %v229 = vmul.f32 %v140, %v210
  %v230 = vmul.f32 %v145, %v210
  %v231 = vmul.f32 %v150, %v210
  %v232 = vmul.f32 %v155, %v210
  %v233 = vmul.f32 %v160, %v210
  %v234 = vmul.f32 %v165, %v210
  %v235 = vmul.f32 %v170, %v210
  %v236 = vmul.f32 %v175, %v210
  %v237 = vmul.f32 %v180, %v210
  %v238 = vmul.f32 %v185, %v210
  %v239 = vmul.f32 %v190, %v210
  %v240 = vmul.f32 %v195, %v210
  %v241 = vmul.f32 %v200, %v210
  %v242 = vmul.f32 %v205, %v210
  %243 = vset.pattern.permute.xlu0 1
  %244 = vperm.xlu0 %243, %v14
  %v245 = vpop.permute.xlu0 %244
  %247 = vset.pattern.permute.xlu0 1
  %248 = vperm.xlu0 %247, %v15
  %v249 = vpop.permute.xlu0 %248
  %251 = vset.pattern.permute.xlu0 1
  %252 = vperm.xlu0 %251, %v16
  %v253 = vpop.permute.xlu0 %252
  %255 = vset.pattern.permute.xlu0 1
  %256 = vperm.xlu0 %255, %v17
  %v257 = vpop.permute.xlu0 %256
  %259 = vset.pattern.permute.xlu0 1
  %260 = vperm.xlu0 %259, %v18
  %v261 = vpop.permute.xlu0 %260
  %263 = vset.pattern.permute.xlu0 1
  %264 = vperm.xlu0 %263, %v19
  %v265 = vpop.permute.xlu0 %264
  %267 = vset.pattern.permute.xlu0 1
  %268 = vperm.xlu0 %267, %v20
  %v269 = vpop.permute.xlu0 %268
  %271 = vset.pattern.permute.xlu0 1
  %272 = vperm.xlu0 %271, %v21
  %v273 = vpop.permute.xlu0 %272
  %275 = vset.pattern.permute.xlu0 1
  %276 = vperm.xlu0 %275, %v22
  %v277 = vpop.permute.xlu0 %276
  %279 = vset.pattern.permute.xlu0 1
  %280 = vperm.xlu0 %279, %v23
  %v281 = vpop.permute.xlu0 %280
  %283 = vset.pattern.permute.xlu0 1
  %284 = vperm.xlu0 %283, %v24
  %v285 = vpop.permute.xlu0 %284
  %287 = vset.pattern.permute.xlu0 1
  %288 = vperm.xlu0 %287, %v25
  %v289 = vpop.permute.xlu0 %288
  %291 = vset.pattern.permute.xlu0 1
  %292 = vperm.xlu0 %291, %v26
  %v293 = vpop.permute.xlu0 %292
  %295 = vset.pattern.permute.xlu0 1
  %296 = vperm.xlu0 %295, %v27
  %v297 = vpop.permute.xlu0 %296
  %299 = vset.pattern.permute.xlu0 1
  %300 = vperm.xlu0 %299, %v28
  %v301 = vpop.permute.xlu0 %300
  %303 = vset.pattern.permute.xlu0 1
  %304 = vperm.xlu0 %303, %v29
  %v305 = vpop.permute.xlu0 %304
  %307 = vset.pattern.permute.xlu0 1
  %308 = vperm.xlu0 %307, %v30
  %v309 = vpop.permute.xlu0 %308
  %311 = vset.pattern.permute.xlu0 1
  %312 = vperm.xlu0 %311, %v31
  %v313 = vpop.permute.xlu0 %312
  %315 = vset.pattern.permute.xlu0 1
  %316 = vperm.xlu0 %315, %v32
  %v317 = vpop.permute.xlu0 %316
  %319 = vset.pattern.permute.xlu0 1
  %320 = vperm.xlu0 %319, %v33
  %v321 = vpop.permute.xlu0 %320
  %323 = vset.pattern.permute.xlu0 1
  %324 = vperm.xlu0 %323, %v34
  %v325 = vpop.permute.xlu0 %324
  %327 = vset.pattern.permute.xlu0 1
  %328 = vperm.xlu0 %327, %v35
  %v329 = vpop.permute.xlu0 %328
  %331 = vset.pattern.permute.xlu0 1
  %332 = vperm.xlu0 %331, %v36
  %v333 = vpop.permute.xlu0 %332
  %335 = vset.pattern.permute.xlu0 1
  %336 = vperm.xlu0 %335, %v37
  %v337 = vpop.permute.xlu0 %336
  %339 = vset.pattern.permute.xlu0 1
  %340 = vperm.xlu0 %339, %v38
  %v341 = vpop.permute.xlu0 %340
  %343 = vset.pattern.permute.xlu0 1
  %344 = vperm.xlu0 %343, %v39
  %v345 = vpop.permute.xlu0 %344
  %347 = vset.pattern.permute.xlu0 1
  %348 = vperm.xlu0 %347, %v40
  %v349 = vpop.permute.xlu0 %348
  %351 = vset.pattern.permute.xlu0 1
  %352 = vperm.xlu0 %351, %v41
  %v353 = vpop.permute.xlu0 %352
  %355 = vset.pattern.permute.xlu0 1
  %356 = vperm.xlu0 %355, %v42
  %v357 = vpop.permute.xlu0 %356
  %359 = vset.pattern.permute.xlu0 1
  %360 = vperm.xlu0 %359, %v43
  %v361 = vpop.permute.xlu0 %360
  %363 = vset.pattern.permute.xlu0 1
  %364 = vperm.xlu0 %363, %v44
  %v365 = vpop.permute.xlu0 %364
  %367 = vset.pattern.permute.xlu0 1
  %368 = vperm.xlu0 %367, %v45
  %v369 = vpop.permute.xlu0 %368
  %v371 = vlaneseq
  %v372 = vshrl.u32 %v371, 7
  %v373 = vsub.s32 1, %v372
  %v374 = vrot.slane %v46, %v373
  %v375 = vmul.f32 %v245, %v374
  %v376 = vmul.f32 %v249, %v374
  %v377 = vmul.f32 %v253, %v374
  %v378 = vmul.f32 %v257, %v374
  %v379 = vmul.f32 %v261, %v374
  %v380 = vmul.f32 %v265, %v374
  %v381 = vmul.f32 %v269, %v374
  %v382 = vmul.f32 %v273, %v374
  %v383 = vmul.f32 %v277, %v374
  %v384 = vmul.f32 %v281, %v374
  %v385 = vmul.f32 %v285, %v374
  %v386 = vmul.f32 %v289, %v374
  %v387 = vmul.f32 %v293, %v374
  %v388 = vmul.f32 %v297, %v374
  %v389 = vmul.f32 %v301, %v374
  %v390 = vmul.f32 %v305, %v374
  %v391 = vmul.f32 %v309, %v374
  %v392 = vmul.f32 %v313, %v374
  %v393 = vmul.f32 %v317, %v374
  %v394 = vmul.f32 %v321, %v374
  %v395 = vmul.f32 %v325, %v374
  %v396 = vmul.f32 %v329, %v374
  %v397 = vmul.f32 %v333, %v374
  %v398 = vmul.f32 %v337, %v374
  %v399 = vmul.f32 %v341, %v374
  %v400 = vmul.f32 %v345, %v374
  %v401 = vmul.f32 %v349, %v374
  %v402 = vmul.f32 %v353, %v374
  %v403 = vmul.f32 %v357, %v374
  %v404 = vmul.f32 %v361, %v374
  %v405 = vmul.f32 %v365, %v374
  %v406 = vmul.f32 %v369, %v374
  %v407 = vadd.f32 %v211, %v375
  %v408 = vadd.f32 %v212, %v376
  %v409 = vadd.f32 %v213, %v377
  %v410 = vadd.f32 %v214, %v378
  %v411 = vadd.f32 %v215, %v379
  %v412 = vadd.f32 %v216, %v380
  %v413 = vadd.f32 %v217, %v381
  %v414 = vadd.f32 %v218, %v382
  %v415 = vadd.f32 %v219, %v383
  %v416 = vadd.f32 %v220, %v384
  %v417 = vadd.f32 %v221, %v385
  %v418 = vadd.f32 %v222, %v386
  %v419 = vadd.f32 %v223, %v387
  %v420 = vadd.f32 %v224, %v388
  %v421 = vadd.f32 %v225, %v389
  %v422 = vadd.f32 %v226, %v390
  %v423 = vadd.f32 %v227, %v391
  %v424 = vadd.f32 %v228, %v392
  %v425 = vadd.f32 %v229, %v393
  %v426 = vadd.f32 %v230, %v394
  %v427 = vadd.f32 %v231, %v395
  %v428 = vadd.f32 %v232, %v396
  %v429 = vadd.f32 %v233, %v397
  %v430 = vadd.f32 %v234, %v398
  %v431 = vadd.f32 %v235, %v399
  %v432 = vadd.f32 %v236, %v400
  %v433 = vadd.f32 %v237, %v401
  %v434 = vadd.f32 %v238, %v402
  %v435 = vadd.f32 %v239, %v403
  %v436 = vadd.f32 %v240, %v404
  %v437 = vadd.f32 %v241, %v405
  %v438 = vadd.f32 %v242, %v406
  %v439 = vld [vmem:[%s2] sm:$0x1]
  %v441 = vlaneseq
  %v442 = vshrl.u32 %v441, 7
  %v443 = vsub.s32 0, %v442
  %v444 = vrot.slane %v439, %v443
  %v446 = vadd.f32 %v407, %v444
  %v447 = vadd.f32 %v408, %v444
  %v448 = vadd.f32 %v409, %v444
  %v449 = vadd.f32 %v410, %v444
  %v450 = vadd.f32 %v411, %v444
  %v451 = vadd.f32 %v412, %v444
  %v452 = vadd.f32 %v413, %v444
  %v453 = vadd.f32 %v414, %v444
  %v454 = vadd.f32 %v415, %v444
  %v455 = vadd.f32 %v416, %v444
  %v456 = vadd.f32 %v417, %v444
  %v457 = vadd.f32 %v418, %v444
  %v458 = vadd.f32 %v419, %v444
  %v459 = vadd.f32 %v420, %v444
  %v460 = vadd.f32 %v421, %v444
  %v461 = vadd.f32 %v422, %v444
  %v462 = vadd.f32 %v423, %v444
  %v463 = vadd.f32 %v424, %v444
  %v464 = vadd.f32 %v425, %v444
  %v465 = vadd.f32 %v426, %v444
  %v466 = vadd.f32 %v427, %v444
  %v467 = vadd.f32 %v428, %v444
  %v468 = vadd.f32 %v429, %v444
  %v469 = vadd.f32 %v430, %v444
  %v470 = vadd.f32 %v431, %v444
  %v471 = vadd.f32 %v432, %v444
  %v472 = vadd.f32 %v433, %v444
  %v473 = vadd.f32 %v434, %v444
  %v474 = vadd.f32 %v435, %v444
  %v475 = vadd.f32 %v436, %v444
  %v476 = vadd.f32 %v437, %v444
  %v477 = vadd.f32 %v438, %v444
  %v478 = vtanh.pop %v446
  %v479 = vtanh.pop %v447
  %v480 = vtanh.pop %v448
  %v481 = vtanh.pop %v449
  %v482 = vtanh.pop %v450
  %v483 = vtanh.pop %v451
  %v484 = vtanh.pop %v452
  %v485 = vtanh.pop %v453
  %v486 = vtanh.pop %v454
  %v487 = vtanh.pop %v455
  %v488 = vtanh.pop %v456
  %v489 = vtanh.pop %v457
  %v490 = vtanh.pop %v458
  %v491 = vtanh.pop %v459
  %v492 = vtanh.pop %v460
  %v493 = vtanh.pop %v461
  %v494 = vtanh.pop %v462
  %v495 = vtanh.pop %v463
  %v496 = vtanh.pop %v464
  %v497 = vtanh.pop %v465
  %v498 = vtanh.pop %v466
  %v499 = vtanh.pop %v467
  %v500 = vtanh.pop %v468
  %v501 = vtanh.pop %v469
  %v502 = vtanh.pop %v470
  %v503 = vtanh.pop %v471
  %v504 = vtanh.pop %v472
  %v505 = vtanh.pop %v473
  %v506 = vtanh.pop %v474
  %v507 = vtanh.pop %v475
  %v508 = vtanh.pop %v476
  %v509 = vtanh.pop %v477
  %vm510 = vcmask 523264
  %511 = vst.msk [vmem:[%s3] sm:$0xff] %vm510, %v478
  %512 = vst.msk [vmem:[%s3 + $0x8] sm:$0xff] %vm510, %v479
  %513 = vst.msk [vmem:[%s3 + $0x10] sm:$0xff] %vm510, %v480
  %514 = vst.msk [vmem:[%s3 + $0x18] sm:$0xff] %vm510, %v481
  %515 = vst.msk [vmem:[%s3 + $0x20] sm:$0xff] %vm510, %v482
  %516 = vst.msk [vmem:[%s3 + $0x28] sm:$0xff] %vm510, %v483
  %517 = vst.msk [vmem:[%s3 + $0x30] sm:$0xff] %vm510, %v484
  %518 = vst.msk [vmem:[%s3 + $0x38] sm:$0xff] %vm510, %v485
  %519 = vst.msk [vmem:[%s3 + $0x40] sm:$0xff] %vm510, %v486
  %520 = vst.msk [vmem:[%s3 + $0x48] sm:$0xff] %vm510, %v487
  %521 = vst.msk [vmem:[%s3 + $0x50] sm:$0xff] %vm510, %v488
  %522 = vst.msk [vmem:[%s3 + $0x58] sm:$0xff] %vm510, %v489
  %523 = vst.msk [vmem:[%s3 + $0x60] sm:$0xff] %vm510, %v490
  %524 = vst.msk [vmem:[%s3 + $0x68] sm:$0xff] %vm510, %v491
  %525 = vst.msk [vmem:[%s3 + $0x70] sm:$0xff] %vm510, %v492
  %526 = vst.msk [vmem:[%s3 + $0x78] sm:$0xff] %vm510, %v493
  %527 = vst.msk [vmem:[%s3 + $0x80] sm:$0xff] %vm510, %v494
  %528 = vst.msk [vmem:[%s3 + $0x88] sm:$0xff] %vm510, %v495
  %529 = vst.msk [vmem:[%s3 + $0x90] sm:$0xff] %vm510, %v496
  %530 = vst.msk [vmem:[%s3 + $0x98] sm:$0xff] %vm510, %v497
  %531 = vst.msk [vmem:[%s3 + $0xa0] sm:$0xff] %vm510, %v498
  %532 = vst.msk [vmem:[%s3 + $0xa8] sm:$0xff] %vm510, %v499
  %533 = vst.msk [vmem:[%s3 + $0xb0] sm:$0xff] %vm510, %v500
  %534 = vst.msk [vmem:[%s3 + $0xb8] sm:$0xff] %vm510, %v501
  %535 = vst.msk [vmem:[%s3 + $0xc0] sm:$0xff] %vm510, %v502
  %536 = vst.msk [vmem:[%s3 + $0xc8] sm:$0xff] %vm510, %v503
  %537 = vst.msk [vmem:[%s3 + $0xd0] sm:$0xff] %vm510, %v504
  %538 = vst.msk [vmem:[%s3 + $0xd8] sm:$0xff] %vm510, %v505
  %539 = vst.msk [vmem:[%s3 + $0xe0] sm:$0xff] %vm510, %v506
  %540 = vst.msk [vmem:[%s3 + $0xe8] sm:$0xff] %vm510, %v507
  %541 = vst.msk [vmem:[%s3 + $0xf0] sm:$0xff] %vm510, %v508
  %542 = vst.msk [vmem:[%s3 + $0xf8] sm:$0xff] %vm510, %v509
  // Predicated region
  $region14: #{tpu_custom_call.1} parent=0 // pred_check
    _
  $region15: #{tpu_custom_call.1} parent=0 // pred_check_branch
    %544 = sbr.rel (0) target = $region17
  $region16: #{tpu_custom_call.1} parent=0 // pred_region
    _
  $region17: #{tpu_custom_call.1} parent=0 // pred_fallthru
    _
  // Predicated region
  $region18: #{tpu_custom_call.1} parent=0 // pred_check
    _
  $region19: #{tpu_custom_call.1} parent=0 // pred_check_branch
    %546 = sbr.rel (0) target = $region21
  $region20: #{tpu_custom_call.1} parent=0 // pred_region
    _
  $region21: #{tpu_custom_call.1} parent=0 // pred_fallthru
    _

</llo_original>
